<compile_context>
chip_gen: v7x
topology: tpu7x:2x2x1
jax: 0.10.0
libtpu: 0.0.40
codegen_flags: <defaults>
</compile_context>

<pallas_src>
import jax
import jax.numpy as jnp
from jax.experimental import pallas as pl
from jax.experimental.pallas import tpu as pltpu


def _round_up(x, m):
    return ((x + m - 1) // m) * m


def _pad2d(x, rows, cols):
    pr, pc = rows - x.shape[0], cols - x.shape[1]
    if pr or pc:
        x = jnp.pad(x, ((0, pr), (0, pc)))
    return x


def _decoder_step_kernel(tok_ref, state_ref, hh_ref, ih_ref, ho_ref,
                         out_ref, logits_ref):
    """Fused: out = tanh(state @ hh + ih[token]);  logits = out @ ho.

    All operands are whole-array VMEM residents (padded lane-dense shapes);
    token is a (Bp,) int32 vector in SMEM.
    """
    Bp = out_ref.shape[0]
    Vp = ih_ref.shape[0]

    # 1) Embedding gather: B dynamic-sublane slice reads from VMEM-resident ih.
    #    Tokens are clamped to the valid row range (PyTorch would raise on OOB;
    #    here the contract is clamp-instead-of-fault).
    rows = []
    for b in range(Bp):
        t = jnp.clip(tok_ref[b], 0, Vp - 1)
        rows.append(ih_ref[pl.ds(t, 1), :])
    emb = jnp.concatenate(rows, axis=0)            # (Bp, Hp), dtype == ih.dtype

    # 2) Recurrence matmul on the MXU, f32 accumulation.
    pre = jnp.dot(state_ref[...], hh_ref[...],
                  preferred_element_type=jnp.float32)

    # 3) tanh epilogue + fused `pred` matmul.  One lane-dense store per output.
    new_state = jnp.tanh(pre + emb.astype(jnp.float32))
    out_ref[...] = new_state.astype(out_ref.dtype)
    logits_ref[...] = jnp.dot(
        new_state.astype(ho_ref.dtype), ho_ref[...],
        preferred_element_type=jnp.float32,
    ).astype(logits_ref.dtype)


def decoder_rnn_step(state, token, hh, ih, ho):
    """Fused DecoderRNN.forward + DecoderRNN.pred.

    Returns (out, logits) with
        out    = tanh(state @ hh + ih[token])   (== DecoderRNN.forward)
        logits = out @ ho                       (== DecoderRNN.pred(out))
    """
    B, H = state.shape
    V = ih.shape[0]
    assert hh.shape == (H, H) and ih.shape == (V, H) and ho.shape == (H, V)

    # Pad to TPU-friendly shapes: sublane multiple of 8, lane multiple of 128.
    Bp = _round_up(B, 8)
    Hp = _round_up(H, 128)
    Vp = _round_up(V, 128)

    state_p = _pad2d(state, Bp, Hp)
    hh_p = _pad2d(hh, Hp, Hp)
    ih_p = _pad2d(ih, Vp, Hp)
    ho_p = _pad2d(ho, Hp, Vp)
    token_p = jnp.pad(token.astype(jnp.int32), (0, Bp - B))

    # Scoped-VMEM limit sized to the actual resident footprint (v5e default is
    # only 16 MiB; v7x physical ceiling is 64 MiB).
    resident_bytes = sum(int(a.size) * a.dtype.itemsize
                         for a in (state_p, hh_p, ih_p, ho_p))
    resident_bytes += (Bp * Hp + Bp * Vp) * 4      # outputs
    vmem_limit = min(64 << 20, max(2 * resident_bytes + (1 << 20), 16 << 20))

    out_p, logits_p = pl.pallas_call(
        _decoder_step_kernel,
        out_shape=(
            jax.ShapeDtypeStruct((Bp, Hp), state.dtype),   # out (padded)
            jax.ShapeDtypeStruct((Bp, Vp), state.dtype),   # logits (padded)
        ),
        in_specs=[
            pl.BlockSpec(memory_space=pltpu.MemorySpace.SMEM),  # token  (Bp,) i32
            pl.BlockSpec(memory_space=pltpu.MemorySpace.VMEM),  # state  (Bp,Hp)
            pl.BlockSpec(memory_space=pltpu.MemorySpace.VMEM),  # hh     (Hp,Hp)
            pl.BlockSpec(memory_space=pltpu.MemorySpace.VMEM),  # ih     (Vp,Hp)
            pl.BlockSpec(memory_space=pltpu.MemorySpace.VMEM),  # ho     (Hp,Vp)
        ],
        out_specs=(
            pl.BlockSpec(memory_space=pltpu.MemorySpace.VMEM),
            pl.BlockSpec(memory_space=pltpu.MemorySpace.VMEM),
        ),
        compiler_params=pltpu.CompilerParams(vmem_limit_bytes=vmem_limit),
    )(token_p, state_p, hh_p, ih_p, ho_p)

    # Slice padding back off.
    return out_p[:B, :H], logits_p[:B, :V]


if __name__ == "__main__":
    key = jax.random.PRNGKey(0)
    k_ih, k_hh, k_ho, k_state, k_tok = jax.random.split(key, 5)

    vocab_size = 16
    hidden_size = 32
    batch = 8

    # Parameter init mirroring torch.normal(0, 0.02, shape).
    ih = 0.02 * jax.random.normal(k_ih, (vocab_size, hidden_size), jnp.float32)
    hh = 0.02 * jax.random.normal(k_hh, (hidden_size, hidden_size), jnp.float32)
    ho = 0.02 * jax.random.normal(k_ho, (hidden_size, vocab_size), jnp.float32)

    state = jax.random.normal(k_state, (batch, hidden_size), jnp.float32)
    token = jax.random.randint(k_tok, (batch,), 0, vocab_size, jnp.int32)

    out, logits = decoder_rnn_step(state, token, hh, ih, ho)
    out = jax.block_until_ready(out)
    logits = jax.block_until_ready(logits)

    # Plain-JAX reference (exact PyTorch semantics).
    ref_out = jnp.tanh(state @ hh + ih[token])
    ref_logits = ref_out @ ho
    assert jnp.allclose(out, ref_out, atol=1e-5, rtol=1e-5)
    assert jnp.allclose(logits, ref_logits, atol=1e-5, rtol=1e-5)

    print("KERNEL_OK")
</pallas_src>

<mosaic_0001>
module attributes {stable_mosaic.version = 11 : i64} {
  func.func @_decoder_step_kernel(%arg0: memref<8xi32, #tpu.memory_space<smem>>, %arg1: memref<8x128xf32, #tpu.memory_space<vmem>>, %arg2: memref<128x128xf32, #tpu.memory_space<vmem>>, %arg3: memref<128x128xf32, #tpu.memory_space<vmem>>, %arg4: memref<128x128xf32, #tpu.memory_space<vmem>>, %arg5: memref<8x128xf32, #tpu.memory_space<vmem>>, %arg6: memref<8x128xf32, #tpu.memory_space<vmem>>) attributes {dimension_semantics = [], scalar_prefetch = 0 : i64, scratch_operands = 0 : i64, tpu.core_type = #tpu.core_type<tc>} {
    %c0 = arith.constant 0 : index
    %0 = memref.load %arg0[%c0] : memref<8xi32, #tpu.memory_space<smem>>
    %c0_i32 = arith.constant 0 : i32
    %c127_i32 = arith.constant 127 : i32
    %1 = arith.maxsi %c0_i32, %0 : i32
    %2 = arith.minsi %c127_i32, %1 : i32
    %3 = arith.index_cast %2 : i32 to index
    %c0_0 = arith.constant 0 : index
    %4 = vector.load %arg3[%3, %c0_0] : memref<128x128xf32, #tpu.memory_space<vmem>>, vector<1x128xf32>
    %c1 = arith.constant 1 : index
    %5 = memref.load %arg0[%c1] : memref<8xi32, #tpu.memory_space<smem>>
    %c0_i32_1 = arith.constant 0 : i32
    %c127_i32_2 = arith.constant 127 : i32
    %6 = arith.maxsi %c0_i32_1, %5 : i32
    %7 = arith.minsi %c127_i32_2, %6 : i32
    %8 = arith.index_cast %7 : i32 to index
    %c0_3 = arith.constant 0 : index
    %9 = vector.load %arg3[%8, %c0_3] : memref<128x128xf32, #tpu.memory_space<vmem>>, vector<1x128xf32>
    %c2 = arith.constant 2 : index
    %10 = memref.load %arg0[%c2] : memref<8xi32, #tpu.memory_space<smem>>
    %c0_i32_4 = arith.constant 0 : i32
    %c127_i32_5 = arith.constant 127 : i32
    %11 = arith.maxsi %c0_i32_4, %10 : i32
    %12 = arith.minsi %c127_i32_5, %11 : i32
    %13 = arith.index_cast %12 : i32 to index
    %c0_6 = arith.constant 0 : index
    %14 = vector.load %arg3[%13, %c0_6] : memref<128x128xf32, #tpu.memory_space<vmem>>, vector<1x128xf32>
    %c3 = arith.constant 3 : index
    %15 = memref.load %arg0[%c3] : memref<8xi32, #tpu.memory_space<smem>>
    %c0_i32_7 = arith.constant 0 : i32
    %c127_i32_8 = arith.constant 127 : i32
    %16 = arith.maxsi %c0_i32_7, %15 : i32
    %17 = arith.minsi %c127_i32_8, %16 : i32
    %18 = arith.index_cast %17 : i32 to index
    %c0_9 = arith.constant 0 : index
    %19 = vector.load %arg3[%18, %c0_9] : memref<128x128xf32, #tpu.memory_space<vmem>>, vector<1x128xf32>
    %c4 = arith.constant 4 : index
    %20 = memref.load %arg0[%c4] : memref<8xi32, #tpu.memory_space<smem>>
    %c0_i32_10 = arith.constant 0 : i32
    %c127_i32_11 = arith.constant 127 : i32
    %21 = arith.maxsi %c0_i32_10, %20 : i32
    %22 = arith.minsi %c127_i32_11, %21 : i32
    %23 = arith.index_cast %22 : i32 to index
    %c0_12 = arith.constant 0 : index
    %24 = vector.load %arg3[%23, %c0_12] : memref<128x128xf32, #tpu.memory_space<vmem>>, vector<1x128xf32>
    %c5 = arith.constant 5 : index
    %25 = memref.load %arg0[%c5] : memref<8xi32, #tpu.memory_space<smem>>
    %c0_i32_13 = arith.constant 0 : i32
    %c127_i32_14 = arith.constant 127 : i32
    %26 = arith.maxsi %c0_i32_13, %25 : i32
    %27 = arith.minsi %c127_i32_14, %26 : i32
    %28 = arith.index_cast %27 : i32 to index
    %c0_15 = arith.constant 0 : index
    %29 = vector.load %arg3[%28, %c0_15] : memref<128x128xf32, #tpu.memory_space<vmem>>, vector<1x128xf32>
    %c6 = arith.constant 6 : index
    %30 = memref.load %arg0[%c6] : memref<8xi32, #tpu.memory_space<smem>>
    %c0_i32_16 = arith.constant 0 : i32
    %c127_i32_17 = arith.constant 127 : i32
    %31 = arith.maxsi %c0_i32_16, %30 : i32
    %32 = arith.minsi %c127_i32_17, %31 : i32
    %33 = arith.index_cast %32 : i32 to index
    %c0_18 = arith.constant 0 : index
    %34 = vector.load %arg3[%33, %c0_18] : memref<128x128xf32, #tpu.memory_space<vmem>>, vector<1x128xf32>
    %c7 = arith.constant 7 : index
    %35 = memref.load %arg0[%c7] : memref<8xi32, #tpu.memory_space<smem>>
    %c0_i32_19 = arith.constant 0 : i32
    %c127_i32_20 = arith.constant 127 : i32
    %36 = arith.maxsi %c0_i32_19, %35 : i32
    %37 = arith.minsi %c127_i32_20, %36 : i32
    %38 = arith.index_cast %37 : i32 to index
    %c0_21 = arith.constant 0 : index
    %39 = vector.load %arg3[%38, %c0_21] : memref<128x128xf32, #tpu.memory_space<vmem>>, vector<1x128xf32>
    %40 = tpu.concatenate %4, %9, %14, %19, %24, %29, %34, %39 in 0 : vector<1x128xf32>, vector<1x128xf32>, vector<1x128xf32>, vector<1x128xf32>, vector<1x128xf32>, vector<1x128xf32>, vector<1x128xf32>, vector<1x128xf32> -> vector<8x128xf32>
    %c0_22 = arith.constant 0 : index
    %c0_23 = arith.constant 0 : index
    %41 = vector.load %arg1[%c0_22, %c0_23] : memref<8x128xf32, #tpu.memory_space<vmem>>, vector<8x128xf32>
    %c0_24 = arith.constant 0 : index
    %c0_25 = arith.constant 0 : index
    %42 = vector.load %arg2[%c0_24, %c0_25] : memref<128x128xf32, #tpu.memory_space<vmem>>, vector<128x128xf32>
    %cst = arith.constant dense<0.000000e+00> : vector<8x128xf32>
    %43 = tpu.matmul %41, %42, %cst {dimension_numbers = #tpu.dot_dimension_numbers<[1], [0], [0], [1], [0, 0, 1, 1], [], []>} : vector<8x128xf32>, vector<128x128xf32>, vector<8x128xf32> -> vector<8x128xf32>
    %44 = arith.addf %43, %40 : vector<8x128xf32>
    %45 = math.tanh %44 : vector<8x128xf32>
    %c0_26 = arith.constant 0 : index
    %c0_27 = arith.constant 0 : index
    %46 = vector.load %arg5[%c0_26, %c0_27] : memref<8x128xf32, #tpu.memory_space<vmem>>, vector<8x128xf32>
    tpu.vector_store %arg5[%c0_26, %c0_27], %45 {strides = array<i32>} : memref<8x128xf32, #tpu.memory_space<vmem>>, vector<8x128xf32>,
    %c0_28 = arith.constant 0 : index
    %c0_29 = arith.constant 0 : index
    %47 = vector.load %arg4[%c0_28, %c0_29] : memref<128x128xf32, #tpu.memory_space<vmem>>, vector<128x128xf32>
    %cst_30 = arith.constant dense<0.000000e+00> : vector<8x128xf32>
    %48 = tpu.matmul %45, %47, %cst_30 {dimension_numbers = #tpu.dot_dimension_numbers<[1], [0], [0], [1], [0, 0, 1, 1], [], []>} : vector<8x128xf32>, vector<128x128xf32>, vector<8x128xf32> -> vector<8x128xf32>
    %c0_31 = arith.constant 0 : index
    %c0_32 = arith.constant 0 : index
    %49 = vector.load %arg6[%c0_31, %c0_32] : memref<8x128xf32, #tpu.memory_space<vmem>>, vector<8x128xf32>
    tpu.vector_store %arg6[%c0_31, %c0_32], %48 {strides = array<i32>} : memref<8x128xf32, #tpu.memory_space<vmem>>, vector<8x128xf32>,
    return
  }
}

</mosaic_0001>

<llo_original>
// kernel: tpu_custom_call.1
$region0: #{tpu_custom_call.1}
  #allocation0 [shape = 'u32[]', space=smem, size = 0x4, offset = 0x4, fixed_abs, tag = 'smem constant byte address 0x4 - core index']
  #allocation1 [shape = 'u32[144,128]{1,0:T(1,128)}', space=vmem, size = 0x12000, scoped, tag = 'internal scratch']
  %s0 = inlined_call_operand.hbm [shape: s32[8], index: 0, kind: input, shape index: {}]
  %s1 = inlined_call_operand.hbm [shape: f32[8,128], index: 1, kind: input, shape index: {}]
  %s2 = inlined_call_operand.hbm [shape: f32[128,128], index: 2, kind: input, shape index: {}]
  %s3 = inlined_call_operand.hbm [shape: f32[128,128], index: 3, kind: input, shape index: {}]
  %s4 = inlined_call_operand.hbm [shape: f32[128,128], index: 4, kind: input, shape index: {}]
  %s5 = inlined_call_operand.hbm [shape: f32[8,128], index: 5, kind: output, shape index: {0}]
  %s6 = inlined_call_operand.hbm [shape: f32[8,128], index: 6, kind: output, shape index: {1}]
  %7 = xla_tuple %s5, %s6
  %s8 = sld [smem:[#allocation0]]
  $region58: #{tpu_custom_call.1} parent=0
    _
  %s10 = ssub.s32 1, %s8
  %s11 = scalar_select 0, %s10, %s8
  $region1: #{tpu_custom_call.1} parent=0
    #allocation2 [shape = 'u8[512]{0}', space=smem, size = 0x200, scoped, tag = 'input window, operand 0, single buffered']
    #allocation3 [shape = 's32[1]{0}', space=sflag, size = 0x4, scoped, tag = 'scoped memory for tpu_custom_call.1']
    #allocation4 [shape = 's32[1]{0}', space=sflag, size = 0x4, scoped, tag = 'scoped memory for tpu_custom_call.1']
    #allocation5 [shape = 's32[1]{0}', space=sflag, size = 0x4, scoped, tag = 'scoped memory for tpu_custom_call.1']
    #allocation6 [shape = 'u8[4096]{0}', space=vmem, size = 0x1000, scoped, tag = 'input window, operand 1, single buffered']
    #allocation7 [shape = 'u8[65536]{0}', space=vmem, size = 0x10000, scoped, tag = 'input window, operand 2, single buffered']
    #allocation8 [shape = 's32[1]{0}', space=sflag, size = 0x4, scoped, tag = 'scoped memory for tpu_custom_call.1']
    #allocation9 [shape = 'u8[65536]{0}', space=vmem, size = 0x10000, scoped, tag = 'input window, operand 3, single buffered']
    #allocation10 [shape = 'u8[65536]{0}', space=vmem, size = 0x10000, scoped, tag = 'input window, operand 4, single buffered']
    #allocation11 [shape = 's32[1]{0}', space=sflag, size = 0x4, scoped, tag = 'scoped memory for tpu_custom_call.1']
    #allocation12 [shape = 'u8[4096]{0}', space=vmem, size = 0x1000, scoped, tag = 'output window, operand 0, single buffered']
    #allocation13 [shape = 'u8[4096]{0}', space=vmem, size = 0x1000, scoped, tag = 'output window, operand 1, single buffered']
    #allocation14 [shape = 's32[1]{0}', space=sflag, size = 0x4, scoped, tag = 'scoped memory for tpu_custom_call.1']
    %12 = vsyncpa [#allocation5], 0
    %13 = vsyncpa [#allocation3], 0
    %14 = vsyncpa [#allocation8], 0
    %15 = vsyncpa [#allocation11], 0
    %16 = vsyncpa [#allocation4], 0
    %17 = vsyncpa [#allocation14], 0
    // Predicated region
    $region2: #{tpu_custom_call.1} parent=1 // pred_check
      _
    $region3: #{tpu_custom_call.1} parent=1 // pred_check_branch
      %19 = sbr.rel (0) target = $region5
    $region4: #{tpu_custom_call.1} parent=1 // pred_region
      %s21 = ssub.s32 16, 16
      %22 = vsyncadd [#allocation5], %s21
      %25 = dma.hbm_to_smem %s0, 16, [#allocation2], [#allocation5]
    $region5: #{tpu_custom_call.1} parent=1 // pred_fallthru
      _
    // Predicated region
    $region6: #{tpu_custom_call.1} parent=1 // pred_check
      _
    $region7: #{tpu_custom_call.1} parent=1 // pred_check_branch
      %27 = sbr.rel (0) target = $region9
    $region8: #{tpu_custom_call.1} parent=1 // pred_region
      %s29 = ssub.s32 128, 128
      %30 = vsyncadd [#allocation3], %s29
      %s32 = sshll.u32 [#allocation6], 4
      %s33 = int_to_ptr.vmem [resolvable:$true] %s32
      %35 = dma.hbm_to_vmem [thread:$0]  %s1, 128, %s33, [#allocation3]
    $region9: #{tpu_custom_call.1} parent=1 // pred_fallthru
      _
    // Predicated region
    $region10: #{tpu_custom_call.1} parent=1 // pred_check
      _
    $region11: #{tpu_custom_call.1} parent=1 // pred_check_branch
      %37 = sbr.rel (0) target = $region13
    $region12: #{tpu_custom_call.1} parent=1 // pred_region
      %s39 = ssub.s32 2048, 2048
      %40 = vsyncadd [#allocation8], %s39
      %s41 = sshll.u32 [#allocation7], 4
      %s42 = int_to_ptr.vmem [resolvable:$true] %s41
      %47 = dma.hbm_to_vmem [thread:$0]  %s2, 2048, %s42, [#allocation8], 128, 128, 8
    $region13: #{tpu_custom_call.1} parent=1 // pred_fallthru
      _
    // Predicated region
    $region14: #{tpu_custom_call.1} parent=1 // pred_check
      _
    $region15: #{tpu_custom_call.1} parent=1 // pred_check_branch
      %49 = sbr.rel (0) target = $region17
    $region16: #{tpu_custom_call.1} parent=1 // pred_region
      %s51 = ssub.s32 2048, 2048
      %52 = vsyncadd [#allocation8], %s51
      %s53 = sshll.u32 [#allocation9], 4
      %s54 = int_to_ptr.vmem [resolvable:$true] %s53
      %59 = dma.hbm_to_vmem [thread:$0]  %s3, 2048, %s54, [#allocation8], 128, 128, 8
    $region17: #{tpu_custom_call.1} parent=1 // pred_fallthru
      _
    // Predicated region
    $region18: #{tpu_custom_call.1} parent=1 // pred_check
      _
    $region19: #{tpu_custom_call.1} parent=1 // pred_check_branch
      %61 = sbr.rel (0) target = $region21
    $region20: #{tpu_custom_call.1} parent=1 // pred_region
      %s63 = ssub.s32 2048, 2048
      %64 = vsyncadd [#allocation11], %s63
      %s65 = sshll.u32 [#allocation10], 4
      %s66 = int_to_ptr.vmem [resolvable:$true] %s65
      %71 = dma.hbm_to_vmem [thread:$0]  %s4, 2048, %s66, [#allocation11], 128, 128, 8
    $region21: #{tpu_custom_call.1} parent=1 // pred_fallthru
      _
    // Predicated region
    $region22: #{tpu_custom_call.1} parent=1 // pred_check
      _
    $region23: #{tpu_custom_call.1} parent=1 // pred_check_branch
      %73 = sbr.rel (0) target = $region25
    $region24: #{tpu_custom_call.1} parent=1 // pred_region
      %74 = dma.done [#allocation5], 16
    $region25: #{tpu_custom_call.1} parent=1 // pred_fallthru
      _
    // Predicated region
    $region26: #{tpu_custom_call.1} parent=1 // pred_check
      _
    $region27: #{tpu_custom_call.1} parent=1 // pred_check_branch
      %76 = sbr.rel (0) target = $region29
    $region28: #{tpu_custom_call.1} parent=1 // pred_region
      %77 = dma.done [#allocation3], 128
    $region29: #{tpu_custom_call.1} parent=1 // pred_fallthru
      _
    // Predicated region
    $region30: #{tpu_custom_call.1} parent=1 // pred_check
      _
    $region31: #{tpu_custom_call.1} parent=1 // pred_check_branch
      %79 = sbr.rel (0) target = $region33
    $region32: #{tpu_custom_call.1} parent=1 // pred_region
      %80 = dma.done [#allocation8], 2048
    $region33: #{tpu_custom_call.1} parent=1 // pred_fallthru
      _
    // Predicated region
    $region34: #{tpu_custom_call.1} parent=1 // pred_check
      _
    $region35: #{tpu_custom_call.1} parent=1 // pred_check_branch
      %82 = sbr.rel (0) target = $region37
    $region36: #{tpu_custom_call.1} parent=1 // pred_region
      %83 = dma.done [#allocation8], 2048
    $region37: #{tpu_custom_call.1} parent=1 // pred_fallthru
      _
    // Predicated region
    $region38: #{tpu_custom_call.1} parent=1 // pred_check
      _
    $region39: #{tpu_custom_call.1} parent=1 // pred_check_branch
      %85 = sbr.rel (0) target = $region41
    $region40: #{tpu_custom_call.1} parent=1 // pred_region
      %86 = dma.done [#allocation11], 2048
    $region41: #{tpu_custom_call.1} parent=1 // pred_fallthru
      _
    %87 = sfence
    %s88 = sld [smem:[#allocation2]]
    %p89 = scmp.gt.s32.totalorder %s88, 0
    %s90 = scalar_select %p89, %s88, 0
    %p91 = scmp.lt.s32.totalorder %s90, 127
    %s92 = scalar_select %p91, %s90, 127
    %s93 = scalar_lea.vmem [#allocation9], %s92
    %v94 = vld [vmem:[%s93] sm:$0x1]
    %s95 = sld [smem:[#allocation2 + $0x1]]
    %p96 = scmp.gt.s32.totalorder %s95, 0
    %s97 = scalar_select %p96, %s95, 0
    %p98 = scmp.lt.s32.totalorder %s97, 127
    %s99 = scalar_select %p98, %s97, 127
    %s100 = scalar_lea.vmem [#allocation9], %s99
    %v101 = vld [vmem:[%s100] sm:$0x1]
    %s102 = sld [smem:[#allocation2 + $0x2]]
    %p103 = scmp.gt.s32.totalorder %s102, 0
    %s104 = scalar_select %p103, %s102, 0
    %p105 = scmp.lt.s32.totalorder %s104, 127
    %s106 = scalar_select %p105, %s104, 127
    %s107 = scalar_lea.vmem [#allocation9], %s106
    %v108 = vld [vmem:[%s107] sm:$0x1]
    %s109 = sld [smem:[#allocation2 + $0x3]]
    %p110 = scmp.gt.s32.totalorder %s109, 0
    %s111 = scalar_select %p110, %s109, 0
    %p112 = scmp.lt.s32.totalorder %s111, 127
    %s113 = scalar_select %p112, %s111, 127
    %s114 = scalar_lea.vmem [#allocation9], %s113
    %v115 = vld [vmem:[%s114] sm:$0x1]
    %s116 = sld [smem:[#allocation2 + $0x4]]
    %p117 = scmp.gt.s32.totalorder %s116, 0
    %s118 = scalar_select %p117, %s116, 0
    %p119 = scmp.lt.s32.totalorder %s118, 127
    %s120 = scalar_select %p119, %s118, 127
    %s121 = scalar_lea.vmem [#allocation9], %s120
    %v122 = vld [vmem:[%s121] sm:$0x1]
    %s123 = sld [smem:[#allocation2 + $0x5]]
    %p124 = scmp.gt.s32.totalorder %s123, 0
    %s125 = scalar_select %p124, %s123, 0
    %p126 = scmp.lt.s32.totalorder %s125, 127
    %s127 = scalar_select %p126, %s125, 127
    %s128 = scalar_lea.vmem [#allocation9], %s127
    %v129 = vld [vmem:[%s128] sm:$0x1]
    %s130 = sld [smem:[#allocation2 + $0x6]]
    %p131 = scmp.gt.s32.totalorder %s130, 0
    %s132 = scalar_select %p131, %s130, 0
    %p133 = scmp.lt.s32.totalorder %s132, 127
    %s134 = scalar_select %p133, %s132, 127
    %s135 = scalar_lea.vmem [#allocation9], %s134
    %v136 = vld [vmem:[%s135] sm:$0x1]
    %s137 = sld [smem:[#allocation2 + $0x7]]
    %p138 = scmp.gt.s32.totalorder %s137, 0
    %s139 = scalar_select %p138, %s137, 0
    %p140 = scmp.lt.s32.totalorder %s139, 127
    %s141 = scalar_select %p140, %s139, 127
    %s142 = scalar_lea.vmem [#allocation9], %s141
    %v143 = vld [vmem:[%s142] sm:$0x1]
    %v145 = vrot.slane %v101, 7
    %v148 = vrot.slane %v108, 6
    %v151 = vrot.slane %v115, 5
    %v154 = vrot.slane %v122, 4
    %v157 = vrot.slane %v129, 3
    %v160 = vrot.slane %v136, 2
    %v163 = vrot.slane %v143, 1
    %vm165 = vcmask 1040384
    %v166 = vsel %vm165, %v94, %v145
    %vm167 = vcmask 1041408
    %v168 = vsel %vm167, %v166, %v148
    %vm169 = vcmask 1042432
    %v170 = vsel %vm169, %v168, %v151
    %vm171 = vcmask 1043456
    %v172 = vsel %vm171, %v170, %v154
    %vm173 = vcmask 1044480
    %v174 = vsel %vm173, %v172, %v157
    %vm175 = vcmask 1045504
    %v176 = vsel %vm175, %v174, %v160
    %vm177 = vcmask 1046528
    %v178 = vsel %vm177, %v176, %v163
    %v179 = vld [vmem:[#allocation6] sm:$0xff]
    %v180 = vld [vmem:[#allocation7] sm:$0xff]
    %v181 = vld [vmem:[#allocation7 + $0x8] sm:$0xff]
    %v182 = vld [vmem:[#allocation7 + $0x10] sm:$0xff]
    %v183 = vld [vmem:[#allocation7 + $0x18] sm:$0xff]
    %v184 = vld [vmem:[#allocation7 + $0x20] sm:$0xff]
    %v185 = vld [vmem:[#allocation7 + $0x28] sm:$0xff]
    %v186 = vld [vmem:[#allocation7 + $0x30] sm:$0xff]
    %v187 = vld [vmem:[#allocation7 + $0x38] sm:$0xff]
    %v188 = vld [vmem:[#allocation7 + $0x40] sm:$0xff]
    %v189 = vld [vmem:[#allocation7 + $0x48] sm:$0xff]
    %v190 = vld [vmem:[#allocation7 + $0x50] sm:$0xff]
    %v191 = vld [vmem:[#allocation7 + $0x58] sm:$0xff]
    %v192 = vld [vmem:[#allocation7 + $0x60] sm:$0xff]
    %v193 = vld [vmem:[#allocation7 + $0x68] sm:$0xff]
    %v194 = vld [vmem:[#allocation7 + $0x70] sm:$0xff]
    %v195 = vld [vmem:[#allocation7 + $0x78] sm:$0xff]
    %196 = vmatprep.subr.mxu0 0.0
    %197 = vmatpush1.msra.mxu0 %v180
    %198 = vmatprep.subr.mxu0 0.0
    %199 = vmatpush1.msra.mxu0 %v181
    %200 = vmatprep.subr.mxu0 0.0
    %201 = vmatpush1.msra.mxu0 %v182
    %202 = vmatprep.subr.mxu0 0.0
    %203 = vmatpush1.msra.mxu0 %v183
    %204 = vmatprep.subr.mxu0 0.0
    %205 = vmatpush1.msra.mxu0 %v184
    %206 = vmatprep.subr.mxu0 0.0
    %207 = vmatpush1.msra.mxu0 %v185
    %208 = vmatprep.subr.mxu0 0.0
    %209 = vmatpush1.msra.mxu0 %v186
    %210 = vmatprep.subr.mxu0 0.0
    %211 = vmatpush1.msra.mxu0 %v187
    %212 = vmatprep.subr.mxu0 0.0
    %213 = vmatpush1.msra.mxu0 %v188
    %214 = vmatprep.subr.mxu0 0.0
    %215 = vmatpush1.msra.mxu0 %v189
    %216 = vmatprep.subr.mxu0 0.0
    %217 = vmatpush1.msra.mxu0 %v190
    %218 = vmatprep.subr.mxu0 0.0
    %219 = vmatpush1.msra.mxu0 %v191
    %220 = vmatprep.subr.mxu0 0.0
    %221 = vmatpush1.msra.mxu0 %v192
    %222 = vmatprep.subr.mxu0 0.0
    %223 = vmatpush1.msra.mxu0 %v193
    %224 = vmatprep.subr.mxu0 0.0
    %225 = vmatpush1.msra.mxu0 %v194
    %226 = vmatprep.subr.mxu0 0.0
    %227 = vmatpush1.msra.mxu0 %v195
    %228 = vmatprep.subr.mxu0 0.0
    %229 = vmatpush1.msra.mxu0 0.0
    %230 = vmatprep.subr.mxu0 0.0
    %231 = vmatpush1.msra.mxu0 0.0
    %232 = vmatprep.subr.mxu0 0.0
    %233 = vmatpush1.msra.mxu0 0.0
    %234 = vmatprep.subr.mxu0 0.0
    %235 = vmatpush1.msra.mxu0 0.0
    %236 = vmatprep.subr.mxu0 0.0
    %237 = vmatpush1.msra.mxu0 0.0
    %238 = vmatprep.subr.mxu0 0.0
    %239 = vmatpush1.msra.mxu0 0.0
    %240 = vmatprep.subr.mxu0 0.0
    %241 = vmatpush1.msra.mxu0 0.0
    %242 = vmatprep.subr.mxu0 0.0
    %243 = vmatpush1.msra.mxu0 0.0
    %244 = vmatprep.subr.mxu0 0.0
    %245 = vmatpush1.msra.mxu0 0.0
    %246 = vmatprep.subr.mxu0 0.0
    %247 = vmatpush1.msra.mxu0 0.0
    %248 = vmatprep.subr.mxu0 0.0
    %249 = vmatpush1.msra.mxu0 0.0
    %250 = vmatprep.subr.mxu0 0.0
    %251 = vmatpush1.msra.mxu0 0.0
    %252 = vmatprep.subr.mxu0 0.0
    %253 = vmatpush1.msra.mxu0 0.0
    %254 = vmatprep.subr.mxu0 0.0
    %255 = vmatpush1.msra.mxu0 0.0
    %256 = vmatprep.subr.mxu0 0.0
    %257 = vmatpush1.msra.mxu0 0.0
    %258 = vmatprep.subr.mxu0 0.0
    %259 = vmatpush1.msra.mxu0 0.0
    %260 = vmatprep.mubr.f32.mxu0 0.0
    %261 = vmatmul.mubr.f32.gmra.mrb[0].mxu0 %v179
    %v262 = vpop.f32.mrb[0].mxu0
    %v263 = vadd.f32 %v178, %v262
    %v264 = vpop.f32.mrb[0].mxu0
    %265 = vdwg.mxu0
    %v266 = vtanh.pop %v263
    %267 = vst [vmem:[#allocation12] sm:$0xff] %v266
    %v268 = vld [vmem:[#allocation10] sm:$0xff]
    %v269 = vld [vmem:[#allocation10 + $0x8] sm:$0xff]
    %v270 = vld [vmem:[#allocation10 + $0x10] sm:$0xff]
    %v271 = vld [vmem:[#allocation10 + $0x18] sm:$0xff]
    %v272 = vld [vmem:[#allocation10 + $0x20] sm:$0xff]
    %v273 = vld [vmem:[#allocation10 + $0x28] sm:$0xff]
    %v274 = vld [vmem:[#allocation10 + $0x30] sm:$0xff]
    %v275 = vld [vmem:[#allocation10 + $0x38] sm:$0xff]
    %v276 = vld [vmem:[#allocation10 + $0x40] sm:$0xff]
    %v277 = vld [vmem:[#allocation10 + $0x48] sm:$0xff]
    %v278 = vld [vmem:[#allocation10 + $0x50] sm:$0xff]
    %v279 = vld [vmem:[#allocation10 + $0x58] sm:$0xff]
    %v280 = vld [vmem:[#allocation10 + $0x60] sm:$0xff]
    %v281 = vld [vmem:[#allocation10 + $0x68] sm:$0xff]
    %v282 = vld [vmem:[#allocation10 + $0x70] sm:$0xff]
    %v283 = vld [vmem:[#allocation10 + $0x78] sm:$0xff]
    %284 = vmatprep.subr.mxu0 0.0
    %285 = vmatpush1.msra.mxu0 %v268
    %286 = vmatprep.subr.mxu0 0.0
    %287 = vmatpush1.msra.mxu0 %v269
    %288 = vmatprep.subr.mxu0 0.0
    %289 = vmatpush1.msra.mxu0 %v270
    %290 = vmatprep.subr.mxu0 0.0
    %291 = vmatpush1.msra.mxu0 %v271
    %292 = vmatprep.subr.mxu0 0.0
    %293 = vmatpush1.msra.mxu0 %v272
    %294 = vmatprep.subr.mxu0 0.0
    %295 = vmatpush1.msra.mxu0 %v273
    %296 = vmatprep.subr.mxu0 0.0
    %297 = vmatpush1.msra.mxu0 %v274
    %298 = vmatprep.subr.mxu0 0.0
    %299 = vmatpush1.msra.mxu0 %v275
    %300 = vmatprep.subr.mxu0 0.0
    %301 = vmatpush1.msra.mxu0 %v276
    %302 = vmatprep.subr.mxu0 0.0
    %303 = vmatpush1.msra.mxu0 %v277
    %304 = vmatprep.subr.mxu0 0.0
    %305 = vmatpush1.msra.mxu0 %v278
    %306 = vmatprep.subr.mxu0 0.0
    %307 = vmatpush1.msra.mxu0 %v279
    %308 = vmatprep.subr.mxu0 0.0
    %309 = vmatpush1.msra.mxu0 %v280
    %310 = vmatprep.subr.mxu0 0.0
    %311 = vmatpush1.msra.mxu0 %v281
    %312 = vmatprep.subr.mxu0 0.0
    %313 = vmatpush1.msra.mxu0 %v282
    %314 = vmatprep.subr.mxu0 0.0
    %315 = vmatpush1.msra.mxu0 %v283
    %316 = vmatprep.subr.mxu0 0.0
    %317 = vmatpush1.msra.mxu0 0.0
    %318 = vmatprep.subr.mxu0 0.0
    %319 = vmatpush1.msra.mxu0 0.0
    %320 = vmatprep.subr.mxu0 0.0
    %321 = vmatpush1.msra.mxu0 0.0
    %322 = vmatprep.subr.mxu0 0.0
    %323 = vmatpush1.msra.mxu0 0.0
    %324 = vmatprep.subr.mxu0 0.0
    %325 = vmatpush1.msra.mxu0 0.0
    %326 = vmatprep.subr.mxu0 0.0
    %327 = vmatpush1.msra.mxu0 0.0
    %328 = vmatprep.subr.mxu0 0.0
    %329 = vmatpush1.msra.mxu0 0.0
    %330 = vmatprep.subr.mxu0 0.0
    %331 = vmatpush1.msra.mxu0 0.0
    %332 = vmatprep.subr.mxu0 0.0
    %333 = vmatpush1.msra.mxu0 0.0
    %334 = vmatprep.subr.mxu0 0.0
    %335 = vmatpush1.msra.mxu0 0.0
    %336 = vmatprep.subr.mxu0 0.0
    %337 = vmatpush1.msra.mxu0 0.0
    %338 = vmatprep.subr.mxu0 0.0
    %339 = vmatpush1.msra.mxu0 0.0
    %340 = vmatprep.subr.mxu0 0.0
    %341 = vmatpush1.msra.mxu0 0.0
    %342 = vmatprep.subr.mxu0 0.0
    %343 = vmatpush1.msra.mxu0 0.0
    %344 = vmatprep.subr.mxu0 0.0
    %345 = vmatpush1.msra.mxu0 0.0
    %346 = vmatprep.subr.mxu0 0.0
    %347 = vmatpush1.msra.mxu0 0.0
    %348 = vmatprep.mubr.f32.mxu0 0.0
    %349 = vmatmul.mubr.f32.gmra.mrb[0].mxu0 %v266
    %v350 = vpop.f32.mrb[0].mxu0
    %v351 = vadd.f32 0.0, %v350
    %v352 = vpop.f32.mrb[0].mxu0
    %353 = vdwg.mxu0
    %354 = vst [vmem:[#allocation13] sm:$0xff] %v351
    // Predicated region
    $region42: #{tpu_custom_call.1} parent=1 // pred_check
      _
    $region43: #{tpu_custom_call.1} parent=1 // pred_check_branch
      %356 = sbr.rel (0) target = $region45
    $region44: #{tpu_custom_call.1} parent=1 // pred_region
      %s358 = ssub.s32 128, 128
      %359 = vsyncadd [#allocation4], %s358
      %s361 = sshll.u32 [#allocation12], 4
      %s362 = int_to_ptr.vmem [resolvable:$true] %s361
      %364 = dma.vmem_to_hbm [thread:$0]  %s362, 128, %s5, [#allocation4]
    $region45: #{tpu_custom_call.1} parent=1 // pred_fallthru
      _
    // Predicated region
    $region46: #{tpu_custom_call.1} parent=1 // pred_check
      _
    $region47: #{tpu_custom_call.1} parent=1 // pred_check_branch
      %366 = sbr.rel (0) target = $region49
    $region48: #{tpu_custom_call.1} parent=1 // pred_region
      %s368 = ssub.s32 128, 128
      %369 = vsyncadd [#allocation14], %s368
      %s371 = sshll.u32 [#allocation13], 4
      %s372 = int_to_ptr.vmem [resolvable:$true] %s371
      %374 = dma.vmem_to_hbm [thread:$0]  %s372, 128, %s6, [#allocation14]
    $region49: #{tpu_custom_call.1} parent=1 // pred_fallthru
      _
    // Predicated region
    $region50: #{tpu_custom_call.1} parent=1 // pred_check
      _
    $region51: #{tpu_custom_call.1} parent=1 // pred_check_branch
      %376 = sbr.rel (0) target = $region53
    $region52: #{tpu_custom_call.1} parent=1 // pred_region
      %377 = dma.done [#allocation4], 128
    $region53: #{tpu_custom_call.1} parent=1 // pred_fallthru
      _
    // Predicated region
    $region54: #{tpu_custom_call.1} parent=1 // pred_check
      _
    $region55: #{tpu_custom_call.1} parent=1 // pred_check_branch
      %379 = sbr.rel (0) target = $region57
    $region56: #{tpu_custom_call.1} parent=1 // pred_region
      %380 = dma.done [#allocation14], 128
    $region57: #{tpu_custom_call.1} parent=1 // pred_fallthru
      _
    %381 = vsyncpa [#allocation3], 1
    %382 = vsyncpa [#allocation8], 1
    %383 = vsyncpa [#allocation11], 1
    %384 = vsyncpa [#allocation4], 1
    %385 = vsyncpa [#allocation14], 1
    %386 = vsyncpa [#allocation5], 1

</llo_original>
